<compile_context>
chip_gen: v7x
topology: tpu7x:2x2x1
jax: 0.10.0
libtpu: 0.0.40
codegen_flags: <defaults>
</compile_context>

<pallas_src>
import jax
import jax.numpy as jnp
import numpy as np
from jax.experimental import pallas as pl
from jax.experimental.pallas import tpu as pltpu

LANE = 128
SUBLANE = 8
NEG_INF = -1e30  # large-negative bias for padded class lanes (avoids inf - inf)


def _round_up(x, m):
    return (x + m - 1) // m * m


def _single_buffer_kwargs():
    """pipeline_mode=pl.Buffered(1) for grid-invariant operands, if this JAX supports it."""
    try:
        kw = dict(pipeline_mode=pl.Buffered(1))
        pl.BlockSpec((SUBLANE, LANE), lambda i: (0, 0), **kw)  # probe construction
        return kw
    except Exception:  # pragma: no cover - older JAX without pipeline_mode
        return {}


def _tpu_generation_params():
    """Returns (vmem budget for tile sizing, vmem_limit_bytes, TensorCores per chip)."""
    try:
        kind = jax.devices()[0].device_kind.lower()
    except Exception:
        kind = ""
    if "v7" in kind:            # 64 MiB VMEM per TC, 2 TCs per chip
        return 44 << 20, 56 << 20, 2
    if "v6" in kind:            # 128 MiB VMEM, 1 TC
        return 96 << 20, 100 << 20, 1
    if "v5p" in kind:           # 128 MiB VMEM, megacore (2 TCs)
        return 96 << 20, 100 << 20, 2
    if "v5" in kind:            # v5e / v5 lite: 128 MiB VMEM, 1 TC
        return 96 << 20, 100 << 20, 1
    if "v4" in kind:            # 128 MiB VMEM, megacore (2 TCs)
        return 64 << 20, 96 << 20, 2
    return 24 << 20, 32 << 20, 1  # unknown generation: stay conservative


def _pad2d(a, shape, dtype, fill=0.0):
    """Pad/cast a 2-D array to (shape, dtype); passthrough if it already matches."""
    if a.shape == shape and a.dtype == dtype:
        return a
    out = jnp.full(shape, fill, dtype)
    return out.at[:a.shape[0], :a.shape[1]].set(a.astype(dtype))


def mlp_kernel(x_ref, w1_ref, b1_ref, w2_ref, b2_ref, o_ref, acc_ref):
    k = pl.program_id(1)

    # fc1 partial product for this K tile. The bf16 cast for the MXU happens here
    # (no wrapper-side cast pass); accumulation is f32.
    part = jnp.dot(x_ref[...].astype(jnp.bfloat16), w1_ref[...],
                   preferred_element_type=jnp.float32)

    @pl.when(k == 0)
    def _():
        acc_ref[...] = part

    @pl.when(k > 0)
    def _():
        acc_ref[...] = acc_ref[...] + part

    @pl.when(k == pl.num_programs(1) - 1)
    def _():
        # bias + ReLU in f32 (VPU); fc2 on the MXU with f32 accumulation.
        h = jnp.maximum(acc_ref[...] + b1_ref[...], 0.0)
        logits = jnp.dot(h.astype(w2_ref.dtype), w2_ref[...],
                         preferred_element_type=jnp.float32) + b2_ref[...]
        # Padded class lanes carry bias = -1e30, so exp underflows to 0 and they do
        # not perturb the numerically stable log-softmax over the real classes.
        m = jnp.max(logits, axis=-1, keepdims=True)
        s = logits - m
        lse = jnp.log(jnp.sum(jnp.exp(s), axis=-1, keepdims=True))
        o_ref[...] = (s - lse).astype(o_ref.dtype)


def mlp_forward(x, w1, b1, w2, b2, *, max_tile_b=4096, out_dtype=jnp.bfloat16,
                vmem_budget_bytes=None, vmem_limit_bytes=None):
    """Fused fc1 -> ReLU -> fc2 -> log_softmax(dim=1).

    x: [B, D_in]; w1: [D_in, H]; b1: [H] or [1, H]; w2: [H, D_out]; b2: [D_out] or [1, D_out].
    Returns log-probabilities [B, D_out] in `out_dtype` (bf16 by default).
    """
    B, D_in = x.shape
    H = w1.shape[1]
    D_out = w2.shape[1]

    budget, limit, num_cores = _tpu_generation_params()
    if vmem_budget_bytes is not None:
        budget = vmem_budget_bytes
    if vmem_limit_bytes is not None:
        limit = vmem_limit_bytes

    h_p = _round_up(H, LANE)
    d_out_p = _round_up(D_out, LANE)
    d_in_p = _round_up(D_in, LANE)
    out_bytes = np.dtype(out_dtype).itemsize

    # ---- pick (tile_b, tile_k) under the VMEM budget -------------------------
    def vmem_estimate(tb, tk, nk):
        x_buf = 2 * tb * tk * 4                          # double-buffered x tile (f32 worst case)
        w1_buf = (1 if nk == 1 else 2) * tk * h_p * 2    # bf16 w1 tile(s)
        out_buf = 2 * tb * d_out_p * out_bytes           # double-buffered output tile
        resident = (h_p * d_out_p * 2                    # w2 (single-buffered)
                    + (h_p + d_out_p) * 4                # b1 / b2
                    + tb * h_p * 4)                      # f32 accumulator scratch
        headroom = 3 * tb * (h_p + d_out_p) * 4          # live f32/bf16 intermediates
        return x_buf + w1_buf + out_buf + resident + headroom

    tile_b = tile_k = None
    tb = min(max_tile_b, _round_up(B, SUBLANE))
    while tile_b is None:
        tk = d_in_p
        while True:
            nk = pl.cdiv(d_in_p, tk)
            if vmem_estimate(tb, tk, nk) <= budget:
                tile_b, tile_k = tb, tk
                break
            if tk == LANE:
                break
            tk = max(tk // 2 // LANE * LANE, LANE)
        if tile_b is None:
            if tb == SUBLANE:
                raise ValueError(
                    "MLPClassifier Pallas kernel does not fit the VMEM budget "
                    f"({budget} bytes) even at the smallest tile: "
                    f"D_in={D_in}, H={H}, D_out={D_out}.")
            tb = max(tb // 2 // SUBLANE * SUBLANE, SUBLANE)

    # Use both TensorCores on multi-core chips: make the (parallel) batch axis at
    # least `num_cores` grid steps long when the batch allows it.
    if num_cores > 1 and B > SUBLANE:
        tile_b = min(tile_b, _round_up(pl.cdiv(B, num_cores), SUBLANE))

    n_k = pl.cdiv(d_in_p, tile_k)
    d_in_pad = n_k * tile_k
    b_pad = _round_up(B, tile_b)
    n_b = b_pad // tile_b

    # ---- operand preparation --------------------------------------------------
    # x is fed straight through (original dtype, typically f32) when its shape is
    # already tile-friendly; padding (fused with a bf16 cast to halve the written
    # bytes) only happens when actually needed.
    if x.shape == (b_pad, d_in_pad):
        xk = x
    else:
        xk = _pad2d(x, (b_pad, d_in_pad), jnp.bfloat16)

    w1k = _pad2d(w1, (d_in_pad, h_p), jnp.bfloat16)
    w2k = _pad2d(w2, (h_p, d_out_p), jnp.bfloat16)
    b1k = _pad2d(b1.reshape(1, -1), (1, h_p), jnp.float32, fill=0.0)
    b2k = _pad2d(b2.reshape(1, -1), (1, d_out_p), jnp.float32, fill=NEG_INF)

    single_buf = _single_buffer_kwargs()
    w1_spec = (pl.BlockSpec((tile_k, h_p), lambda i, k: (k, 0), **single_buf)
               if n_k == 1 else
               pl.BlockSpec((tile_k, h_p), lambda i, k: (k, 0)))

    flops = 2 * b_pad * (d_in_pad * h_p + h_p * d_out_p)
    bytes_accessed = (xk.size * xk.dtype.itemsize
                      + w1k.size * 2 + w2k.size * 2
                      + (b1k.size + b2k.size) * 4
                      + b_pad * d_out_p * out_bytes)

    out_padded = pl.pallas_call(
        mlp_kernel,
        out_shape=jax.ShapeDtypeStruct((b_pad, d_out_p), out_dtype),
        grid_spec=pltpu.PrefetchScalarGridSpec(
            num_scalar_prefetch=0,
            grid=(n_b, n_k),
            in_specs=[
                pl.BlockSpec((tile_b, tile_k), lambda i, k: (i, k)),              # x (pipelined)
                w1_spec,                                                          # w1
                pl.BlockSpec((1, h_p), lambda i, k: (0, 0), **single_buf),        # b1 (resident)
                pl.BlockSpec((h_p, d_out_p), lambda i, k: (0, 0), **single_buf),  # w2 (resident)
                pl.BlockSpec((1, d_out_p), lambda i, k: (0, 0), **single_buf),    # b2 (resident)
            ],
            out_specs=pl.BlockSpec((tile_b, d_out_p), lambda i, k: (i, 0)),
            scratch_shapes=[pltpu.VMEM((tile_b, h_p), jnp.float32)],
        ),
        compiler_params=pltpu.CompilerParams(
            dimension_semantics=("parallel", "arbitrary"),
            vmem_limit_bytes=limit,
        ),
        cost_estimate=pl.CostEstimate(
            flops=flops,
            transcendentals=b_pad * (d_out_p + 1),
            bytes_accessed=bytes_accessed,
        ),
    )(xk, w1k, b1k, w2k, b2k)

    if out_padded.shape == (B, D_out):
        return out_padded
    return out_padded[:B, :D_out]


def init_linear(key, in_dim, out_dim):
    """Deterministic init mimicking nn.Linear default (uniform +/- 1/sqrt(in_dim)).
    Returns weight already transposed to [in_dim, out_dim] and bias [1, out_dim]."""
    kw, kb = jax.random.split(key)
    bound = 1.0 / jnp.sqrt(jnp.float32(in_dim))
    w = jax.random.uniform(kw, (in_dim, out_dim), jnp.float32, -bound, bound)
    b = jax.random.uniform(kb, (1, out_dim), jnp.float32, -bound, bound)
    return w, b


if __name__ == "__main__":
    # Small shapes consistent with the module: TF-IDF feature vectors -> classes.
    # TODO(synk): TfidfVectorizer / labels / training loop (optimizer, lr_scheduler)
    # have no Pallas equivalent; only the MLPClassifier forward pass is implemented.
    batch = 8
    input_dim = 128     # stands in for text_mat.shape[1]
    hidden_dim = 64
    output_dim = 8      # stands in for len(set(labels))

    key = jax.random.PRNGKey(0)
    kx, k1, k2 = jax.random.split(key, 3)

    x = jax.random.normal(kx, (batch, input_dim), jnp.float32)
    w1, b1 = init_linear(k1, input_dim, hidden_dim)
    w2, b2 = init_linear(k2, hidden_dim, output_dim)

    out = mlp_forward(x, w1, b1, w2, b2)
    out = jax.block_until_ready(out)
    assert out.shape == (batch, output_dim)
    out_f32 = out.astype(jnp.float32)

    # Reference 1: matched precision path (bf16 MXU operands, f32 accumulation).
    xb, w1b, w2b = (a.astype(jnp.bfloat16) for a in (x, w1, w2))
    h_ref = jnp.maximum(
        jnp.dot(xb, w1b, preferred_element_type=jnp.float32) + b1, 0.0)
    logits_ref = jnp.dot(h_ref.astype(jnp.bfloat16), w2b,
                         preferred_element_type=jnp.float32) + b2
    ref_matched = jax.nn.log_softmax(logits_ref, axis=1)
    assert jnp.allclose(out_f32, ref_matched, atol=2e-2, rtol=2e-2), \
        "mismatch vs matched-precision reference"

    # Reference 2: pure f32 math of the original PyTorch module (loose check).
    ref_f32 = jax.nn.log_softmax(jnp.maximum(x @ w1 + b1, 0.0) @ w2 + b2, axis=1)
    assert jnp.allclose(out_f32, ref_f32, atol=7e-2, rtol=7e-2), \
        "mismatch vs f32 reference"

    print("KERNEL_OK")
</pallas_src>

<mosaic_0001>
module attributes {stable_mosaic.version = 11 : i64} {
  func.func @mlp_kernel(%arg0: i32, %arg1: i32, %arg2: memref<8x128xf32, #tpu.memory_space<vmem>>, %arg3: memref<128x128xbf16, #tpu.memory_space<vmem>>, %arg4: memref<1x128xf32, #tpu.memory_space<vmem>>, %arg5: memref<128x128xbf16, #tpu.memory_space<vmem>>, %arg6: memref<1x128xf32, #tpu.memory_space<vmem>>, %arg7: memref<8x128xbf16, #tpu.memory_space<vmem>>, %arg8: memref<8x128xf32, #tpu.memory_space<vmem>>) attributes {dimension_semantics = [#tpu.dimension_semantics<parallel>, #tpu.dimension_semantics<arbitrary>], iteration_bounds = array<i64: 1, 1>, scalar_prefetch = 0 : i64, scratch_operands = 1 : i64, tpu.core_type = #tpu.core_type<tc>, window_params = [{transform_indices = @transform_0, window_bounds = array<i64: 8, 128>}, {pipeline_mode = #tpu.pipeline_mode<synchronous>, transform_indices = @transform_1, window_bounds = array<i64: 128, 128>}, {pipeline_mode = #tpu.pipeline_mode<synchronous>, transform_indices = @transform_2, window_bounds = array<i64: 1, 128>}, {pipeline_mode = #tpu.pipeline_mode<synchronous>, transform_indices = @transform_3, window_bounds = array<i64: 128, 128>}, {pipeline_mode = #tpu.pipeline_mode<synchronous>, transform_indices = @transform_4, window_bounds = array<i64: 1, 128>}, {transform_indices = @transform_5, window_bounds = array<i64: 8, 128>}]} {
    %c0 = arith.constant 0 : index
    %c0_0 = arith.constant 0 : index
    %0 = vector.load %arg2[%c0, %c0_0] : memref<8x128xf32, #tpu.memory_space<vmem>>, vector<8x128xf32>
    %1 = arith.truncf %0 : vector<8x128xf32> to vector<8x128xbf16>
    %c0_1 = arith.constant 0 : index
    %c0_2 = arith.constant 0 : index
    %2 = vector.load %arg3[%c0_1, %c0_2] : memref<128x128xbf16, #tpu.memory_space<vmem>>, vector<128x128xbf16>
    %cst = arith.constant dense<0.000000e+00> : vector<8x128xf32>
    %3 = tpu.matmul %1, %2, %cst {dimension_numbers = #tpu.dot_dimension_numbers<[1], [0], [0], [1], [0, 0, 1, 1], [], []>} : vector<8x128xbf16>, vector<128x128xbf16>, vector<8x128xf32> -> vector<8x128xf32>
    %c0_i32 = arith.constant 0 : i32
    %4 = arith.cmpi eq, %arg1, %c0_i32 : i32
    %5 = arith.extui %4 : i1 to i32
    %c0_i32_3 = arith.constant 0 : i32
    %6 = arith.cmpi ne, %5, %c0_i32_3 : i32
    scf.if %6 {
      %c0_8 = arith.constant 0 : index
      %c0_9 = arith.constant 0 : index
      %13 = vector.load %arg8[%c0_8, %c0_9] : memref<8x128xf32, #tpu.memory_space<vmem>>, vector<8x128xf32>
      tpu.vector_store %arg8[%c0_8, %c0_9], %3 {strides = array<i32>} : memref<8x128xf32, #tpu.memory_space<vmem>>, vector<8x128xf32>,
    } else {
    }
    %c0_i32_4 = arith.constant 0 : i32
    %7 = arith.cmpi sgt, %arg1, %c0_i32_4 : i32
    %8 = arith.extui %7 : i1 to i32
    %c0_i32_5 = arith.constant 0 : i32
    %9 = arith.cmpi ne, %8, %c0_i32_5 : i32
    scf.if %9 {
      %c0_8 = arith.constant 0 : index
      %c0_9 = arith.constant 0 : index
      %13 = vector.load %arg8[%c0_8, %c0_9] : memref<8x128xf32, #tpu.memory_space<vmem>>, vector<8x128xf32>
      %14 = arith.addf %13, %3 : vector<8x128xf32>
      %c0_10 = arith.constant 0 : index
      %c0_11 = arith.constant 0 : index
      %15 = vector.load %arg8[%c0_10, %c0_11] : memref<8x128xf32, #tpu.memory_space<vmem>>, vector<8x128xf32>
      tpu.vector_store %arg8[%c0_10, %c0_11], %14 {strides = array<i32>} : memref<8x128xf32, #tpu.memory_space<vmem>>, vector<8x128xf32>,
    } else {
    }
    %c0_i32_6 = arith.constant 0 : i32
    %10 = arith.cmpi eq, %arg1, %c0_i32_6 : i32
    %11 = arith.extui %10 : i1 to i32
    %c0_i32_7 = arith.constant 0 : i32
    %12 = arith.cmpi ne, %11, %c0_i32_7 : i32
    scf.if %12 {
      %c0_8 = arith.constant 0 : index
      %c0_9 = arith.constant 0 : index
      %13 = vector.load %arg8[%c0_8, %c0_9] : memref<8x128xf32, #tpu.memory_space<vmem>>, vector<8x128xf32>
      %c0_10 = arith.constant 0 : index
      %c0_11 = arith.constant 0 : index
      %14 = vector.load %arg4[%c0_10, %c0_11] : memref<1x128xf32, #tpu.memory_space<vmem>>, vector<1x128xf32>
      %15 = vector.broadcast %14 : vector<1x128xf32> to vector<8x128xf32>
      %16 = arith.addf %13, %15 : vector<8x128xf32>
      %cst_12 = arith.constant 0.000000e+00 : f32
      %17 = vector.broadcast %cst_12 : f32 to vector<8x128xf32>
      %18 = arith.maximumf %16, %17 : vector<8x128xf32>
      %19 = arith.truncf %18 : vector<8x128xf32> to vector<8x128xbf16>
      %c0_13 = arith.constant 0 : index
      %c0_14 = arith.constant 0 : index
      %20 = vector.load %arg5[%c0_13, %c0_14] : memref<128x128xbf16, #tpu.memory_space<vmem>>, vector<128x128xbf16>
      %cst_15 = arith.constant dense<0.000000e+00> : vector<8x128xf32>
      %21 = tpu.matmul %19, %20, %cst_15 {dimension_numbers = #tpu.dot_dimension_numbers<[1], [0], [0], [1], [0, 0, 1, 1], [], []>} : vector<8x128xbf16>, vector<128x128xbf16>, vector<8x128xf32> -> vector<8x128xf32>
      %c0_16 = arith.constant 0 : index
      %c0_17 = arith.constant 0 : index
      %22 = vector.load %arg6[%c0_16, %c0_17] : memref<1x128xf32, #tpu.memory_space<vmem>>, vector<1x128xf32>
      %23 = vector.broadcast %22 : vector<1x128xf32> to vector<8x128xf32>
      %24 = arith.addf %21, %23 : vector<8x128xf32>
      %cst_18 = arith.constant dense<0xFF800000> : vector<8xf32>
      %25 = vector.multi_reduction <maximumf>, %24, %cst_18 [1] : vector<8x128xf32> to vector<8xf32>
      %26 = vector.shape_cast %25 : vector<8xf32> to vector<8x1xf32>
      %27 = vector.broadcast %26 : vector<8x1xf32> to vector<8x128xf32>
      %28 = arith.subf %24, %27 : vector<8x128xf32>
      %29 = math.exp %28 : vector<8x128xf32>
      %cst_19 = arith.constant dense<0.000000e+00> : vector<8xf32>
      %30 = vector.multi_reduction <add>, %29, %cst_19 [1] : vector<8x128xf32> to vector<8xf32>
      %31 = vector.shape_cast %30 : vector<8xf32> to vector<8x1xf32>
      %32 = math.log %31 : vector<8x1xf32>
      %33 = vector.broadcast %32 : vector<8x1xf32> to vector<8x128xf32>
      %34 = arith.subf %28, %33 : vector<8x128xf32>
      %35 = arith.truncf %34 : vector<8x128xf32> to vector<8x128xbf16>
      %c0_20 = arith.constant 0 : index
      %c0_21 = arith.constant 0 : index
      %36 = vector.load %arg7[%c0_20, %c0_21] : memref<8x128xbf16, #tpu.memory_space<vmem>>, vector<8x128xbf16>
      tpu.vector_store %arg7[%c0_20, %c0_21], %35 {strides = array<i32>} : memref<8x128xbf16, #tpu.memory_space<vmem>>, vector<8x128xbf16>,
    } else {
    }
    return
  }
  func.func @transform_0(%arg0: i32, %arg1: i32) -> (i32, i32) {
    %c0_i32 = arith.constant 0 : i32
    return %arg0, %arg1 : i32, i32
  }
  func.func @transform_1(%arg0: i32, %arg1: i32) -> (i32, i32) {
    %c0_i32 = arith.constant 0 : i32
    %c0_i32_0 = arith.constant 0 : i32
    return %arg1, %c0_i32 : i32, i32
  }
  func.func @transform_2(%arg0: i32, %arg1: i32) -> (i32, i32) {
    %c0_i32 = arith.constant 0 : i32
    %c0_i32_0 = arith.constant 0 : i32
    %c0_i32_1 = arith.constant 0 : i32
    return %c0_i32, %c0_i32_0 : i32, i32
  }
  func.func @transform_3(%arg0: i32, %arg1: i32) -> (i32, i32) {
    %c0_i32 = arith.constant 0 : i32
    %c0_i32_0 = arith.constant 0 : i32
    %c0_i32_1 = arith.constant 0 : i32
    return %c0_i32, %c0_i32_0 : i32, i32
  }
  func.func @transform_4(%arg0: i32, %arg1: i32) -> (i32, i32) {
    %c0_i32 = arith.constant 0 : i32
    %c0_i32_0 = arith.constant 0 : i32
    %c0_i32_1 = arith.constant 0 : i32
    return %c0_i32, %c0_i32_0 : i32, i32
  }
  func.func @transform_5(%arg0: i32, %arg1: i32) -> (i32, i32) {
    %c0_i32 = arith.constant 0 : i32
    %c0_i32_0 = arith.constant 0 : i32
    return %arg0, %c0_i32 : i32, i32
  }
}

</mosaic_0001>

<llo_original>
// kernel: tpu_custom_call.1
$region0: #{tpu_custom_call.1}
  #allocation0 [shape = 'u32[]', space=smem, size = 0x4, offset = 0x4, fixed_abs, tag = 'smem constant byte address 0x4 - core index']
  #allocation1 [shape = 'u32[144,128]{1,0:T(1,128)}', space=vmem, size = 0x12000, scoped, tag = 'internal scratch']
  #allocation2 [shape = 'f32[8,128]{1,0:T(8,128)}', space=vmem, size = 0x1000, scoped, tag = 'scratch operand']
  %s0 = inlined_call_operand.hbm [shape: f32[8,128], index: 0, kind: input, shape index: {}]
  %s1 = inlined_call_operand.hbm [shape: bf16[128,128], index: 1, kind: input, shape index: {}]
  %s2 = inlined_call_operand.vmem [shape: f32[1,128], index: 2, kind: input, shape index: {}]
  %s3 = inlined_call_operand.hbm [shape: bf16[128,128], index: 3, kind: input, shape index: {}]
  %s4 = inlined_call_operand.vmem [shape: f32[1,128], index: 4, kind: input, shape index: {}]
  %s5 = inlined_call_operand.hbm [shape: bf16[8,128], index: 5, kind: output, shape index: {}]
  %s6 = sld [smem:[#allocation0]]
  $region54: #{tpu_custom_call.1} parent=0
    _
  %s8 = ssub.s32 1, %s6
  %s9 = scalar_select 0, %s8, %s6
  $region1: #{tpu_custom_call.1} parent=0
    #allocation3 [shape = 'u8[4096]{0}', space=vmem, size = 0x1000, scoped, tag = 'input window, operand 0, single buffered']
    #allocation4 [shape = 's32[1]{0}', space=sflag, size = 0x4, scoped, tag = 'scoped memory for tpu_custom_call.1']
    #allocation5 [shape = 's32[1]{0}', space=sflag, size = 0x4, scoped, tag = 'scoped memory for tpu_custom_call.1']
    #allocation6 [shape = 'u8[32768]{0}', space=vmem, size = 0x8000, scoped, tag = 'input window, operand 1, single buffered']
    #allocation7 [shape = 's32[1]{0}', space=sflag, size = 0x4, scoped, tag = 'scoped memory for tpu_custom_call.1']
    #allocation8 [shape = 'u8[32768]{0}', space=vmem, size = 0x8000, scoped, tag = 'input window, operand 3, single buffered']
    #allocation9 [shape = 'u8[2048]{0}', space=vmem, size = 0x800, scoped, tag = 'output window, operand 0, single buffered']
    %10 = vsyncpa [#allocation4], 0
    %11 = vsyncpa [#allocation7], 0
    %12 = vsyncpa [#allocation5], 0
    // Predicated region
    $region2: #{tpu_custom_call.1} parent=1 // pred_check
      _
    $region3: #{tpu_custom_call.1} parent=1 // pred_check_branch
      %14 = sbr.rel (0) target = $region5
    $region4: #{tpu_custom_call.1} parent=1 // pred_region
      %s16 = ssub.s32 128, 128
      %17 = vsyncadd [#allocation4], %s16
      %s19 = sshll.u32 [#allocation3], 4
      %s20 = int_to_ptr.vmem [resolvable:$true] %s19
      %22 = dma.hbm_to_vmem [thread:$0]  %s0, 128, %s20, [#allocation4]
    $region5: #{tpu_custom_call.1} parent=1 // pred_fallthru
      _
    // Predicated region
    $region6: #{tpu_custom_call.1} parent=1 // pred_check
      _
    $region7: #{tpu_custom_call.1} parent=1 // pred_check_branch
      %24 = sbr.rel (0) target = $region9
    $region8: #{tpu_custom_call.1} parent=1 // pred_region
      %s26 = ssub.s32 1024, 1024
      %27 = vsyncadd [#allocation7], %s26
      %s28 = sshll.u32 [#allocation6], 4
      %s29 = int_to_ptr.vmem [resolvable:$true] %s28
      %34 = dma.hbm_to_vmem [thread:$0]  %s1, 1024, %s29, [#allocation7], 64, 64, 4
    $region9: #{tpu_custom_call.1} parent=1 // pred_fallthru
      _
    // Predicated region
    $region10: #{tpu_custom_call.1} parent=1 // pred_check
      _
    $region11: #{tpu_custom_call.1} parent=1 // pred_check_branch
      %36 = sbr.rel (0) target = $region13
    $region12: #{tpu_custom_call.1} parent=1 // pred_region
      _
    $region13: #{tpu_custom_call.1} parent=1 // pred_fallthru
      _
    // Predicated region
    $region14: #{tpu_custom_call.1} parent=1 // pred_check
      _
    $region15: #{tpu_custom_call.1} parent=1 // pred_check_branch
      %38 = sbr.rel (0) target = $region17
    $region16: #{tpu_custom_call.1} parent=1 // pred_region
      %s40 = ssub.s32 1024, 1024
      %41 = vsyncadd [#allocation7], %s40
      %s42 = sshll.u32 [#allocation8], 4
      %s43 = int_to_ptr.vmem [resolvable:$true] %s42
      %48 = dma.hbm_to_vmem [thread:$0]  %s3, 1024, %s43, [#allocation7], 64, 64, 4
    $region17: #{tpu_custom_call.1} parent=1 // pred_fallthru
      _
    // Predicated region
    $region18: #{tpu_custom_call.1} parent=1 // pred_check
      _
    $region19: #{tpu_custom_call.1} parent=1 // pred_check_branch
      %50 = sbr.rel (0) target = $region21
    $region20: #{tpu_custom_call.1} parent=1 // pred_region
      _
    $region21: #{tpu_custom_call.1} parent=1 // pred_fallthru
      _
    // Predicated region
    $region22: #{tpu_custom_call.1} parent=1 // pred_check
      _
    $region23: #{tpu_custom_call.1} parent=1 // pred_check_branch
      %52 = sbr.rel (0) target = $region25
    $region24: #{tpu_custom_call.1} parent=1 // pred_region
      %53 = dma.done [#allocation4], 128
    $region25: #{tpu_custom_call.1} parent=1 // pred_fallthru
      _
    // Predicated region
    $region26: #{tpu_custom_call.1} parent=1 // pred_check
      _
    $region27: #{tpu_custom_call.1} parent=1 // pred_check_branch
      %55 = sbr.rel (0) target = $region29
    $region28: #{tpu_custom_call.1} parent=1 // pred_region
      %56 = dma.done [#allocation7], 1024
    $region29: #{tpu_custom_call.1} parent=1 // pred_fallthru
      _
    // Predicated region
    $region30: #{tpu_custom_call.1} parent=1 // pred_check
      _
    $region31: #{tpu_custom_call.1} parent=1 // pred_check_branch
      %58 = sbr.rel (0) target = $region33
    $region32: #{tpu_custom_call.1} parent=1 // pred_region
      %59 = dma.done [#allocation7], 1024
    $region33: #{tpu_custom_call.1} parent=1 // pred_fallthru
      _
    %v61 = vld [vmem:[#allocation3] sm:$0xff]
    %v62 = vpack.c.bf16 %v61, %v61
    %v63 = vld [vmem:[#allocation6] sm:$0xf]
    %v64 = vld [vmem:[#allocation6 + $0x4] sm:$0xf]
    %v65 = vld [vmem:[#allocation6 + $0x8] sm:$0xf]
    %v66 = vld [vmem:[#allocation6 + $0xc] sm:$0xf]
    %v67 = vld [vmem:[#allocation6 + $0x10] sm:$0xf]
    %v68 = vld [vmem:[#allocation6 + $0x14] sm:$0xf]
    %v69 = vld [vmem:[#allocation6 + $0x18] sm:$0xf]
    %v70 = vld [vmem:[#allocation6 + $0x1c] sm:$0xf]
    %v71 = vld [vmem:[#allocation6 + $0x20] sm:$0xf]
    %v72 = vld [vmem:[#allocation6 + $0x24] sm:$0xf]
    %v73 = vld [vmem:[#allocation6 + $0x28] sm:$0xf]
    %v74 = vld [vmem:[#allocation6 + $0x2c] sm:$0xf]
    %v75 = vld [vmem:[#allocation6 + $0x30] sm:$0xf]
    %v76 = vld [vmem:[#allocation6 + $0x34] sm:$0xf]
    %v77 = vld [vmem:[#allocation6 + $0x38] sm:$0xf]
    %v78 = vld [vmem:[#allocation6 + $0x3c] sm:$0xf]
    %v95 = vunpack.c.l.b16 %v63
    %v96 = vunpack.c.l.b16 %v64
    %v97 = vunpack.c.l.b16 %v65
    %v98 = vunpack.c.l.b16 %v66
    %v99 = vunpack.c.l.b16 %v67
    %v100 = vunpack.c.l.b16 %v68
    %v101 = vunpack.c.l.b16 %v69
    %v102 = vunpack.c.l.b16 %v70
    %v103 = vunpack.c.l.b16 %v71
    %v104 = vunpack.c.l.b16 %v72
    %v105 = vunpack.c.l.b16 %v73
    %v106 = vunpack.c.l.b16 %v74
    %v107 = vunpack.c.l.b16 %v75
    %v108 = vunpack.c.l.b16 %v76
    %v109 = vunpack.c.l.b16 %v77
    %v110 = vunpack.c.l.b16 %v78
    %v111 = vpack.c.b16 %v96, %v95
    %v112 = vpack.c.b16 %v98, %v97
    %v113 = vpack.c.b16 %v100, %v99
    %v114 = vpack.c.b16 %v102, %v101
    %v115 = vpack.c.b16 %v104, %v103
    %v116 = vpack.c.b16 %v106, %v105
    %v117 = vpack.c.b16 %v108, %v107
    %v118 = vpack.c.b16 %v110, %v109
    %127 = vmatprep.subr.bf16.mxu0 0
    %128 = vmatpush1.bf16.msra.mxu0 %v111
    %129 = vmatprep.subr.bf16.mxu0 0
    %130 = vmatpush1.bf16.msra.mxu0 %v112
    %131 = vmatprep.subr.bf16.mxu0 0
    %132 = vmatpush1.bf16.msra.mxu0 %v113
    %133 = vmatprep.subr.bf16.mxu0 0
    %134 = vmatpush1.bf16.msra.mxu0 %v114
    %135 = vmatprep.subr.bf16.mxu0 0
    %136 = vmatpush1.bf16.msra.mxu0 %v115
    %137 = vmatprep.subr.bf16.mxu0 0
    %138 = vmatpush1.bf16.msra.mxu0 %v116
    %139 = vmatprep.subr.bf16.mxu0 0
    %140 = vmatpush1.bf16.msra.mxu0 %v117
    %141 = vmatprep.subr.bf16.mxu0 0
    %142 = vmatpush1.bf16.msra.mxu0 %v118
    %143 = vmatprep.subr.bf16.mxu0 0
    %144 = vmatpush1.bf16.msra.mxu0 0
    %145 = vmatprep.subr.bf16.mxu0 0
    %146 = vmatpush1.bf16.msra.mxu0 0
    %147 = vmatprep.subr.bf16.mxu0 0
    %148 = vmatpush1.bf16.msra.mxu0 0
    %149 = vmatprep.subr.bf16.mxu0 0
    %150 = vmatpush1.bf16.msra.mxu0 0
    %151 = vmatprep.subr.bf16.mxu0 0
    %152 = vmatpush1.bf16.msra.mxu0 0
    %153 = vmatprep.subr.bf16.mxu0 0
    %154 = vmatpush1.bf16.msra.mxu0 0
    %155 = vmatprep.subr.bf16.mxu0 0
    %156 = vmatpush1.bf16.msra.mxu0 0
    %157 = vmatprep.subr.bf16.mxu0 0
    %158 = vmatpush1.bf16.msra.mxu0 0
    %159 = vmatprep.mubr.bf16.mxu0 0
    %160 = vmatmul.mubr.bf16.gmra.mrb[0].mxu0 %v62
    %v161 = vpop.f32.mrb[0].mxu0
    %v162 = vadd.f32 0.0, %v161
    %v163 = vpop.f32.mrb[0].mxu0
    %v164 = vpop.f32.mrb[0].mxu0
    %v165 = vpop.f32.mrb[0].mxu0
    %166 = vdwg.mxu0
    %p167 = scmp.eq.s32.totalorder 0, 0
    // Predicated region
    $region34: #{tpu_custom_call.1} parent=1 // pred_check
      %p168 = pneg %p167
    $region35: #{tpu_custom_call.1} parent=1 // pred_check_branch
      %170 = sbr.rel (%p168) target = $region37
    $region36: #{tpu_custom_call.1} parent=1 // pred_region
      %171 = vst [vmem:[#allocation2] sm:$0xff] %v162
    $region37: #{tpu_custom_call.1} parent=1 // pred_fallthru
      _
    %p172 = scmp.gt.s32.totalorder 0, 0
    // Predicated region
    $region38: #{tpu_custom_call.1} parent=1 // pred_check
      %p173 = pneg %p172
    $region39: #{tpu_custom_call.1} parent=1 // pred_check_branch
      %175 = sbr.rel (%p173) target = $region41
    $region40: #{tpu_custom_call.1} parent=1 // pred_region
      %v176 = vld [vmem:[#allocation2] sm:$0xff]
      %v177 = vadd.f32 %v176, %v162
      %178 = vst [vmem:[#allocation2] sm:$0xff] %v177
    $region41: #{tpu_custom_call.1} parent=1 // pred_fallthru
      _
    // Predicated region
    $region42: #{tpu_custom_call.1} parent=1 // pred_check
      %p179 = pneg %p167
    $region43: #{tpu_custom_call.1} parent=1 // pred_check_branch
      %181 = sbr.rel (%p179) target = $region45
    $region44: #{tpu_custom_call.1} parent=1 // pred_region
      %v182 = vld [vmem:[#allocation2] sm:$0xff]
      %v183 = vld [vmem:[%s2] sm:$0x1]
      %v185 = vlaneseq
      %v186 = vshrl.u32 %v185, 7
      %v187 = vsub.s32 0, %v186
      %v188 = vrot.slane %v183, %v187
      %v190 = vadd.f32 %v182, %v188
      %v191 = vmax.f32 %v190, 0.0
      %v192 = vpack.c.bf16 %v191, %v191
      %v193 = vld [vmem:[#allocation8] sm:$0xf]
      %v194 = vld [vmem:[#allocation8 + $0x4] sm:$0xf]
      %v195 = vld [vmem:[#allocation8 + $0x8] sm:$0xf]
      %v196 = vld [vmem:[#allocation8 + $0xc] sm:$0xf]
      %v197 = vld [vmem:[#allocation8 + $0x10] sm:$0xf]
      %v198 = vld [vmem:[#allocation8 + $0x14] sm:$0xf]
      %v199 = vld [vmem:[#allocation8 + $0x18] sm:$0xf]
      %v200 = vld [vmem:[#allocation8 + $0x1c] sm:$0xf]
      %v201 = vld [vmem:[#allocation8 + $0x20] sm:$0xf]
      %v202 = vld [vmem:[#allocation8 + $0x24] sm:$0xf]
      %v203 = vld [vmem:[#allocation8 + $0x28] sm:$0xf]
      %v204 = vld [vmem:[#allocation8 + $0x2c] sm:$0xf]
      %v205 = vld [vmem:[#allocation8 + $0x30] sm:$0xf]
      %v206 = vld [vmem:[#allocation8 + $0x34] sm:$0xf]
      %v207 = vld [vmem:[#allocation8 + $0x38] sm:$0xf]
      %v208 = vld [vmem:[#allocation8 + $0x3c] sm:$0xf]
      %v209 = vld [vmem:[%s4] sm:$0x1]
      %v211 = vlaneseq
      %v212 = vshrl.u32 %v211, 7
      %v213 = vsub.s32 0, %v212
      %v214 = vrot.slane %v209, %v213
      %v232 = vunpack.c.l.b16 %v193
      %v233 = vunpack.c.l.b16 %v194
      %v234 = vunpack.c.l.b16 %v195
      %v235 = vunpack.c.l.b16 %v196
      %v236 = vunpack.c.l.b16 %v197
      %v237 = vunpack.c.l.b16 %v198
      %v238 = vunpack.c.l.b16 %v199
      %v239 = vunpack.c.l.b16 %v200
      %v240 = vunpack.c.l.b16 %v201
      %v241 = vunpack.c.l.b16 %v202
      %v242 = vunpack.c.l.b16 %v203
      %v243 = vunpack.c.l.b16 %v204
      %v244 = vunpack.c.l.b16 %v205
      %v245 = vunpack.c.l.b16 %v206
      %v246 = vunpack.c.l.b16 %v207
      %v247 = vunpack.c.l.b16 %v208
      %v248 = vpack.c.b16 %v233, %v232
      %v249 = vpack.c.b16 %v235, %v234
      %v250 = vpack.c.b16 %v237, %v236
      %v251 = vpack.c.b16 %v239, %v238
      %v252 = vpack.c.b16 %v241, %v240
      %v253 = vpack.c.b16 %v243, %v242
      %v254 = vpack.c.b16 %v245, %v244
      %v255 = vpack.c.b16 %v247, %v246
      %264 = vmatprep.subr.bf16.mxu0 0
      %265 = vmatpush1.bf16.msra.mxu0 %v248
      %266 = vmatprep.subr.bf16.mxu0 0
      %267 = vmatpush1.bf16.msra.mxu0 %v249
      %268 = vmatprep.subr.bf16.mxu0 0
      %269 = vmatpush1.bf16.msra.mxu0 %v250
      %270 = vmatprep.subr.bf16.mxu0 0
      %271 = vmatpush1.bf16.msra.mxu0 %v251
      %272 = vmatprep.subr.bf16.mxu0 0
      %273 = vmatpush1.bf16.msra.mxu0 %v252
      %274 = vmatprep.subr.bf16.mxu0 0
      %275 = vmatpush1.bf16.msra.mxu0 %v253
      %276 = vmatprep.subr.bf16.mxu0 0
      %277 = vmatpush1.bf16.msra.mxu0 %v254
      %278 = vmatprep.subr.bf16.mxu0 0
      %279 = vmatpush1.bf16.msra.mxu0 %v255
      %280 = vmatprep.subr.bf16.mxu0 0
      %281 = vmatpush1.bf16.msra.mxu0 0
      %282 = vmatprep.subr.bf16.mxu0 0
      %283 = vmatpush1.bf16.msra.mxu0 0
      %284 = vmatprep.subr.bf16.mxu0 0
      %285 = vmatpush1.bf16.msra.mxu0 0
      %286 = vmatprep.subr.bf16.mxu0 0
      %287 = vmatpush1.bf16.msra.mxu0 0
      %288 = vmatprep.subr.bf16.mxu0 0
      %289 = vmatpush1.bf16.msra.mxu0 0
      %290 = vmatprep.subr.bf16.mxu0 0
      %291 = vmatpush1.bf16.msra.mxu0 0
      %292 = vmatprep.subr.bf16.mxu0 0
      %293 = vmatpush1.bf16.msra.mxu0 0
      %294 = vmatprep.subr.bf16.mxu0 0
      %295 = vmatpush1.bf16.msra.mxu0 0
      %296 = vmatprep.mubr.bf16.mxu0 0
      %297 = vmatmul.mubr.bf16.gmra.mrb[0].mxu0 %v192
      %v298 = vpop.f32.mrb[0].mxu0
      %v299 = vadd.f32 %v214, %v298
      %v300 = vpop.f32.mrb[0].mxu0
      %v301 = vpop.f32.mrb[0].mxu0
      %v302 = vpop.f32.mrb[0].mxu0
      %303 = vdwg.mxu0
      %304 = vmax.xlane.f32.xlu0 %v299
      %v305 = vpop.xlane.xlu0 %304
      %v306 = vsub.f32 %v299, %v305
      %v307 = vmul.f32 %v306, 1.442695
      %v308 = vpow.pop %v307
      %309 = vadd.xlane.f32.xlu0 %v308
      %v310 = vpop.xlane.xlu0 %309
      %v311 = vlog2.pop %v310
      %v312 = vmul.f32 %v311, 0.6931472
      %v313 = vsub.f32 %v306, %v312
      %v314 = vpack.c.bf16 %v313, %v313
      %315 = vst [vmem:[#allocation9] sm:$0xf] %v314
    $region45: #{tpu_custom_call.1} parent=1 // pred_fallthru
      _
    // Predicated region
    $region46: #{tpu_custom_call.1} parent=1 // pred_check
      _
    $region47: #{tpu_custom_call.1} parent=1 // pred_check_branch
      %317 = sbr.rel (0) target = $region49
    $region48: #{tpu_custom_call.1} parent=1 // pred_region
      %s319 = ssub.s32 64, 64
      %320 = vsyncadd [#allocation5], %s319
      %s322 = sshll.u32 [#allocation9], 4
      %s323 = int_to_ptr.vmem [resolvable:$true] %s322
      %325 = dma.vmem_to_hbm [thread:$0]  %s323, 64, %s5, [#allocation5]
    $region49: #{tpu_custom_call.1} parent=1 // pred_fallthru
      _
    // Predicated region
    $region50: #{tpu_custom_call.1} parent=1 // pred_check
      _
    $region51: #{tpu_custom_call.1} parent=1 // pred_check_branch
      %327 = sbr.rel (0) target = $region53
    $region52: #{tpu_custom_call.1} parent=1 // pred_region
      %328 = dma.done [#allocation5], 64
    $region53: #{tpu_custom_call.1} parent=1 // pred_fallthru
      _
    %329 = vsyncpa [#allocation4], 1
    %330 = vsyncpa [#allocation7], 1
    %331 = vsyncpa [#allocation5], 1

</llo_original>
